<compile_context>
chip_gen: v7x
topology: tpu7x:2x2x1
jax: 0.10.0
libtpu: 0.0.40
codegen_flags: <defaults>
</compile_context>

<pallas_src>
import jax
import jax.numpy as jnp
from jax.experimental import pallas as pl
from jax.experimental.pallas import tpu as pltpu


def _linear_sigmoid_kernel(x_ref, w_ref, o_ref):
    # x_ref: (TILE_B, n_inputs), w_ref: (n_inputs, n_cls_pad) -> (TILE_B, n_cls_pad)
    y = jnp.dot(x_ref[...], w_ref[...], preferred_element_type=jnp.float32)
    # Exact sigmoid via a single EUP tanh: sigmoid(y) = 0.5*tanh(0.5*y) + 0.5.
    # (Garbage rows of a partial last batch block stay finite through tanh and
    #  their stores are masked anyway.)
    o_ref[...] = (0.5 * jnp.tanh(0.5 * y) + 0.5).astype(o_ref.dtype)


def simple_nn_forward(x, weight, *, tile_b_max=512, compute_dtype=None):
    """Pallas equivalent of SimpleNN.forward.

    x:      (batch, n_inputs)     float32
    weight: (n_classes, n_inputs) float32  -- same layout as nn.Linear.weight
    compute_dtype: optional streaming dtype (e.g. jnp.bfloat16 for production;
                   accumulation stays f32 on the MXU).
    returns (batch, n_classes) in x's original dtype.
    """
    batch, n_inputs = x.shape
    n_classes, n_inputs_w = weight.shape
    assert n_inputs == n_inputs_w
    out_dtype = x.dtype

    if compute_dtype is not None:
        x = x.astype(compute_dtype)
        weight = weight.astype(compute_dtype)

    # One-time XLA transpose (amortized over the whole batch): (n_in, n_cls).
    w_t = weight.T

    # Lane-dense output: pad N up to a multiple of 128 with zero columns.
    n_cls_pad = max(128, ((n_classes + 127) // 128) * 128)
    if n_cls_pad != n_classes:
        w_t = jnp.pad(w_t, ((0, 0), (0, n_cls_pad - n_classes)))

    # Batch tile: full batch if small; otherwise sublane-aligned
    # (16 rows/vreg for bf16 packing, 8 for f32).
    align = 16 if w_t.dtype == jnp.bfloat16 else 8
    tile_b = min(tile_b_max, batch)
    if tile_b != batch:
        tile_b = max(align, (tile_b // align) * align)
    grid = (pl.cdiv(batch, tile_b),)

    itemsize = lambda a: jnp.dtype(a).itemsize
    cost = pl.CostEstimate(
        flops=2 * batch * n_inputs * n_cls_pad,
        transcendentals=batch * n_cls_pad,
        bytes_accessed=(
            batch * n_inputs * itemsize(x.dtype)
            + n_inputs * n_cls_pad * itemsize(w_t.dtype)
            + batch * n_cls_pad * itemsize(out_dtype)
        ),
    )

    out = pl.pallas_call(
        _linear_sigmoid_kernel,
        out_shape=jax.ShapeDtypeStruct((batch, n_cls_pad), out_dtype),
        grid=grid,
        in_specs=[
            # x streams block-by-block over the batch axis (auto double-buffered).
            pl.BlockSpec((tile_b, n_inputs), lambda i: (i, 0)),
            # Weight is one full-array block, resident across the grid.
            pl.BlockSpec((n_inputs, n_cls_pad), lambda i: (0, 0)),
        ],
        out_specs=pl.BlockSpec((tile_b, n_cls_pad), lambda i: (i, 0)),
        compiler_params=pltpu.CompilerParams(
            dimension_semantics=("parallel",),
        ),
        cost_estimate=cost,
    )(x, w_t)

    # Slice the lane-padding off.
    return out[:, :n_classes]


if __name__ == "__main__":
    # Deterministic synthetic setup (no checkpoint loading).
    batch, n_inputs, n_classes = 8, 32, 16

    key = jax.random.PRNGKey(0)
    kx, kw = jax.random.split(key)
    x = jax.random.normal(kx, (batch, n_inputs), dtype=jnp.float32)
    # nn.Linear default init: U(-1/sqrt(fan_in), 1/sqrt(fan_in)), shape (out, in)
    bound = 1.0 / (n_inputs ** 0.5)
    weight = jax.random.uniform(
        kw, (n_classes, n_inputs), minval=-bound, maxval=bound, dtype=jnp.float32
    )

    # --- f32 path: matches the PyTorch module's semantics. ---
    out = jax.block_until_ready(simple_nn_forward(x, weight))
    ref = jax.nn.sigmoid(x @ weight.T)
    assert out.shape == (batch, n_classes)
    # Tolerance leaves headroom for default-matmul-precision differences
    # between the Mosaic and XLA f32 dot paths (sigmoid itself is exact now).
    assert jnp.allclose(out, ref, atol=2e-3, rtol=2e-3), float(
        jnp.max(jnp.abs(out - ref))
    )

    # --- bf16-streaming path (production setting): bf16 operands, f32 acc. ---
    out_bf16 = jax.block_until_ready(
        simple_nn_forward(x, weight, compute_dtype=jnp.bfloat16)
    )
    ref_bf16 = jax.nn.sigmoid(
        jnp.dot(
            x.astype(jnp.bfloat16),
            weight.T.astype(jnp.bfloat16),
            preferred_element_type=jnp.float32,
        )
    )
    assert out_bf16.shape == (batch, n_classes)
    assert jnp.allclose(out_bf16, ref_bf16, atol=2e-3, rtol=2e-3), float(
        jnp.max(jnp.abs(out_bf16 - ref_bf16))
    )

    print("KERNEL_OK")
</pallas_src>

<mosaic_0001>
module attributes {stable_mosaic.version = 11 : i64} {
  func.func @_linear_sigmoid_kernel(%arg0: i32, %arg1: memref<8x32xf32, #tpu.memory_space<vmem>>, %arg2: memref<32x128xf32, #tpu.memory_space<vmem>>, %arg3: memref<8x128xf32, #tpu.memory_space<vmem>>) attributes {dimension_semantics = [#tpu.dimension_semantics<parallel>], iteration_bounds = array<i64: 1>, scalar_prefetch = 0 : i64, scratch_operands = 0 : i64, tpu.core_type = #tpu.core_type<tc>, window_params = [{transform_indices = @transform_0, window_bounds = array<i64: 8, 32>}, {pipeline_mode = #tpu.pipeline_mode<synchronous>, transform_indices = @transform_1, window_bounds = array<i64: 32, 128>}, {transform_indices = @transform_2, window_bounds = array<i64: 8, 128>}]} {
    %c0 = arith.constant 0 : index
    %c0_0 = arith.constant 0 : index
    %0 = vector.load %arg1[%c0, %c0_0] : memref<8x32xf32, #tpu.memory_space<vmem>>, vector<8x32xf32>
    %c0_1 = arith.constant 0 : index
    %c0_2 = arith.constant 0 : index
    %1 = vector.load %arg2[%c0_1, %c0_2] : memref<32x128xf32, #tpu.memory_space<vmem>>, vector<32x128xf32>
    %cst = arith.constant dense<0.000000e+00> : vector<8x128xf32>
    %2 = tpu.matmul %0, %1, %cst {dimension_numbers = #tpu.dot_dimension_numbers<[1], [0], [0], [1], [0, 0, 1, 1], [], []>} : vector<8x32xf32>, vector<32x128xf32>, vector<8x128xf32> -> vector<8x128xf32>
    %cst_3 = arith.constant 5.000000e-01 : f32
    %3 = vector.broadcast %cst_3 : f32 to vector<8x128xf32>
    %4 = arith.mulf %3, %2 : vector<8x128xf32>
    %5 = math.tanh %4 : vector<8x128xf32>
    %cst_4 = arith.constant 5.000000e-01 : f32
    %6 = vector.broadcast %cst_4 : f32 to vector<8x128xf32>
    %7 = arith.mulf %6, %5 : vector<8x128xf32>
    %cst_5 = arith.constant 5.000000e-01 : f32
    %8 = vector.broadcast %cst_5 : f32 to vector<8x128xf32>
    %9 = arith.addf %7, %8 : vector<8x128xf32>
    %c0_6 = arith.constant 0 : index
    %c0_7 = arith.constant 0 : index
    %10 = vector.load %arg3[%c0_6, %c0_7] : memref<8x128xf32, #tpu.memory_space<vmem>>, vector<8x128xf32>
    tpu.vector_store %arg3[%c0_6, %c0_7], %9 {strides = array<i32>} : memref<8x128xf32, #tpu.memory_space<vmem>>, vector<8x128xf32>,
    return
  }
  func.func @transform_0(%arg0: i32) -> (i32, i32) {
    %c0_i32 = arith.constant 0 : i32
    %c0_i32_0 = arith.constant 0 : i32
    return %arg0, %c0_i32 : i32, i32
  }
  func.func @transform_1(%arg0: i32) -> (i32, i32) {
    %c0_i32 = arith.constant 0 : i32
    %c0_i32_0 = arith.constant 0 : i32
    %c0_i32_1 = arith.constant 0 : i32
    return %c0_i32, %c0_i32_0 : i32, i32
  }
  func.func @transform_2(%arg0: i32) -> (i32, i32) {
    %c0_i32 = arith.constant 0 : i32
    %c0_i32_0 = arith.constant 0 : i32
    return %arg0, %c0_i32 : i32, i32
  }
}

</mosaic_0001>

<llo_original>
// kernel: tpu_custom_call.1
$region0: #{tpu_custom_call.1}
  #allocation0 [shape = 'u32[]', space=smem, size = 0x4, offset = 0x4, fixed_abs, tag = 'smem constant byte address 0x4 - core index']
  #allocation1 [shape = 'u32[144,128]{1,0:T(1,128)}', space=vmem, size = 0x12000, scoped, tag = 'internal scratch']
  %s0 = inlined_call_operand.hbm [shape: f32[8,32], index: 0, kind: input, shape index: {}]
  %s1 = inlined_call_operand.hbm [shape: f32[32,128], index: 1, kind: input, shape index: {}]
  %s2 = inlined_call_operand.hbm [shape: f32[8,128], index: 2, kind: output, shape index: {}]
  %s3 = sld [smem:[#allocation0]]
  $region26: #{tpu_custom_call.1} parent=0
    _
  %s5 = ssub.s32 1, %s3
  %s6 = scalar_select 0, %s5, %s3
  $region1: #{tpu_custom_call.1} parent=0
    #allocation2 [shape = 'u8[4096]{0}', space=vmem, size = 0x1000, scoped, tag = 'input window, operand 0, single buffered']
    #allocation3 [shape = 's32[1]{0}', space=sflag, size = 0x4, scoped, tag = 'scoped memory for tpu_custom_call.1']
    #allocation4 [shape = 's32[1]{0}', space=sflag, size = 0x4, scoped, tag = 'scoped memory for tpu_custom_call.1']
    #allocation5 [shape = 'u8[16384]{0}', space=vmem, size = 0x4000, scoped, tag = 'input window, operand 1, single buffered']
    #allocation6 [shape = 's32[1]{0}', space=sflag, size = 0x4, scoped, tag = 'scoped memory for tpu_custom_call.1']
    #allocation7 [shape = 'u8[4096]{0}', space=vmem, size = 0x1000, scoped, tag = 'output window, operand 0, single buffered']
    %7 = vsyncpa [#allocation3], 0
    %8 = vsyncpa [#allocation6], 0
    %9 = vsyncpa [#allocation4], 0
    // Predicated region
    $region2: #{tpu_custom_call.1} parent=1 // pred_check
      _
    $region3: #{tpu_custom_call.1} parent=1 // pred_check_branch
      %11 = sbr.rel (0) target = $region5
    $region4: #{tpu_custom_call.1} parent=1 // pred_region
      %s13 = ssub.s32 128, 128
      %14 = vsyncadd [#allocation3], %s13
      %s16 = sshll.u32 [#allocation2], 4
      %s17 = int_to_ptr.vmem [resolvable:$true] %s16
      %19 = dma.hbm_to_vmem [thread:$0]  %s0, 128, %s17, [#allocation3]
    $region5: #{tpu_custom_call.1} parent=1 // pred_fallthru
      _
    // Predicated region
    $region6: #{tpu_custom_call.1} parent=1 // pred_check
      _
    $region7: #{tpu_custom_call.1} parent=1 // pred_check_branch
      %21 = sbr.rel (0) target = $region9
    $region8: #{tpu_custom_call.1} parent=1 // pred_region
      %s23 = ssub.s32 512, 512
      %24 = vsyncadd [#allocation6], %s23
      %s25 = sshll.u32 [#allocation5], 4
      %s26 = int_to_ptr.vmem [resolvable:$true] %s25
      %31 = dma.hbm_to_vmem [thread:$0]  %s1, 512, %s26, [#allocation6], 128, 128, 8
    $region9: #{tpu_custom_call.1} parent=1 // pred_fallthru
      _
    // Predicated region
    $region10: #{tpu_custom_call.1} parent=1 // pred_check
      _
    $region11: #{tpu_custom_call.1} parent=1 // pred_check_branch
      %33 = sbr.rel (0) target = $region13
    $region12: #{tpu_custom_call.1} parent=1 // pred_region
      %34 = dma.done [#allocation3], 128
    $region13: #{tpu_custom_call.1} parent=1 // pred_fallthru
      _
    // Predicated region
    $region14: #{tpu_custom_call.1} parent=1 // pred_check
      _
    $region15: #{tpu_custom_call.1} parent=1 // pred_check_branch
      %36 = sbr.rel (0) target = $region17
    $region16: #{tpu_custom_call.1} parent=1 // pred_region
      %37 = dma.done [#allocation6], 512
    $region17: #{tpu_custom_call.1} parent=1 // pred_fallthru
      _
    %v38 = vld [vmem:[#allocation2] sm:$0xff]
    %v39 = vld [vmem:[#allocation5] sm:$0xff]
    %v40 = vld [vmem:[#allocation5 + $0x8] sm:$0xff]
    %v41 = vld [vmem:[#allocation5 + $0x10] sm:$0xff]
    %v42 = vld [vmem:[#allocation5 + $0x18] sm:$0xff]
    %vm43 = vcmask 261120
    %v45 = vsel %vm43, %v38, 0
    %47 = vmatprep.subr.mxu0 0.0
    %48 = vmatpush1.msra.mxu0 %v39
    %49 = vmatprep.subr.mxu0 0.0
    %50 = vmatpush1.msra.mxu0 %v40
    %51 = vmatprep.subr.mxu0 0.0
    %52 = vmatpush1.msra.mxu0 %v41
    %53 = vmatprep.subr.mxu0 0.0
    %54 = vmatpush1.msra.mxu0 %v42
    %55 = vmatprep.subr.mxu0 0.0
    %56 = vmatpush1.msra.mxu0 0.0
    %57 = vmatprep.subr.mxu0 0.0
    %58 = vmatpush1.msra.mxu0 0.0
    %59 = vmatprep.subr.mxu0 0.0
    %60 = vmatpush1.msra.mxu0 0.0
    %61 = vmatprep.subr.mxu0 0.0
    %62 = vmatpush1.msra.mxu0 0.0
    %63 = vmatprep.subr.mxu0 0.0
    %64 = vmatpush1.msra.mxu0 0.0
    %65 = vmatprep.subr.mxu0 0.0
    %66 = vmatpush1.msra.mxu0 0.0
    %67 = vmatprep.subr.mxu0 0.0
    %68 = vmatpush1.msra.mxu0 0.0
    %69 = vmatprep.subr.mxu0 0.0
    %70 = vmatpush1.msra.mxu0 0.0
    %71 = vmatprep.subr.mxu0 0.0
    %72 = vmatpush1.msra.mxu0 0.0
    %73 = vmatprep.subr.mxu0 0.0
    %74 = vmatpush1.msra.mxu0 0.0
    %75 = vmatprep.subr.mxu0 0.0
    %76 = vmatpush1.msra.mxu0 0.0
    %77 = vmatprep.subr.mxu0 0.0
    %78 = vmatpush1.msra.mxu0 0.0
    %79 = vmatprep.subr.mxu0 0.0
    %80 = vmatpush1.msra.mxu0 0.0
    %81 = vmatprep.subr.mxu0 0.0
    %82 = vmatpush1.msra.mxu0 0.0
    %83 = vmatprep.subr.mxu0 0.0
    %84 = vmatpush1.msra.mxu0 0.0
    %85 = vmatprep.subr.mxu0 0.0
    %86 = vmatpush1.msra.mxu0 0.0
    %87 = vmatprep.subr.mxu0 0.0
    %88 = vmatpush1.msra.mxu0 0.0
    %89 = vmatprep.subr.mxu0 0.0
    %90 = vmatpush1.msra.mxu0 0.0
    %91 = vmatprep.subr.mxu0 0.0
    %92 = vmatpush1.msra.mxu0 0.0
    %93 = vmatprep.subr.mxu0 0.0
    %94 = vmatpush1.msra.mxu0 0.0
    %95 = vmatprep.subr.mxu0 0.0
    %96 = vmatpush1.msra.mxu0 0.0
    %97 = vmatprep.subr.mxu0 0.0
    %98 = vmatpush1.msra.mxu0 0.0
    %99 = vmatprep.subr.mxu0 0.0
    %100 = vmatpush1.msra.mxu0 0.0
    %101 = vmatprep.subr.mxu0 0.0
    %102 = vmatpush1.msra.mxu0 0.0
    %103 = vmatprep.subr.mxu0 0.0
    %104 = vmatpush1.msra.mxu0 0.0
    %105 = vmatprep.subr.mxu0 0.0
    %106 = vmatpush1.msra.mxu0 0.0
    %107 = vmatprep.subr.mxu0 0.0
    %108 = vmatpush1.msra.mxu0 0.0
    %109 = vmatprep.subr.mxu0 0.0
    %110 = vmatpush1.msra.mxu0 0.0
    %111 = vmatprep.mubr.f32.mxu0 0.0
    %112 = vmatmul.mubr.f32.gmra.mrb[0].mxu0 %v45
    %v113 = vpop.f32.mrb[0].mxu0
    %v114 = vadd.f32 0.0, %v113
    %v115 = vpop.f32.mrb[0].mxu0
    %116 = vdwg.mxu0
    %v117 = vmul.f32 %v114, 0.5
    %v118 = vtanh.pop %v117
    %v119 = vmul.f32 %v118, 0.5
    %v120 = vadd.f32 %v119, 0.5
    %121 = vst [vmem:[#allocation7] sm:$0xff] %v120
    // Predicated region
    $region18: #{tpu_custom_call.1} parent=1 // pred_check
      _
    $region19: #{tpu_custom_call.1} parent=1 // pred_check_branch
      %123 = sbr.rel (0) target = $region21
    $region20: #{tpu_custom_call.1} parent=1 // pred_region
      %s125 = ssub.s32 128, 128
      %126 = vsyncadd [#allocation4], %s125
      %s128 = sshll.u32 [#allocation7], 4
      %s129 = int_to_ptr.vmem [resolvable:$true] %s128
      %131 = dma.vmem_to_hbm [thread:$0]  %s129, 128, %s2, [#allocation4]
    $region21: #{tpu_custom_call.1} parent=1 // pred_fallthru
      _
    // Predicated region
    $region22: #{tpu_custom_call.1} parent=1 // pred_check
      _
    $region23: #{tpu_custom_call.1} parent=1 // pred_check_branch
      %133 = sbr.rel (0) target = $region25
    $region24: #{tpu_custom_call.1} parent=1 // pred_region
      %134 = dma.done [#allocation4], 128
    $region25: #{tpu_custom_call.1} parent=1 // pred_fallthru
      _
    %135 = vsyncpa [#allocation3], 1
    %136 = vsyncpa [#allocation6], 1
    %137 = vsyncpa [#allocation4], 1

</llo_original>
